<compile_context>
chip_gen: v7x
topology: tpu7x:2x2x1
jax: 0.10.0
libtpu: 0.0.40
codegen_flags: <defaults>
</compile_context>

<pallas_src>
import math
import jax
import jax.numpy as jnp
from jax import lax
from jax.experimental import pallas as pl
from jax.experimental.pallas import tpu as pltpu

# ----------------------------- config ---------------------------------------
INPUT_DIM   = 32
HIDDEN_DIMS = (32, 32)
CFG_EPS     = 1e-6      # ICNNConfig.eps
INIT_SCALE  = 0.1       # ICNNConfig.init_scale
LN_EPS      = 1e-5      # PyTorch LayerNorm default


def _softplus(x):
    # Matches torch.nn.functional.softplus(beta=1, threshold=20)
    return jnp.where(x > 20.0, x, jnp.log1p(jnp.exp(jnp.minimum(x, 20.0))))


def _layernorm(v, gamma, beta):
    mu = jnp.mean(v, axis=-1, keepdims=True)
    var = jnp.mean((v - mu) ** 2, axis=-1, keepdims=True)
    return (v - mu) * lax.rsqrt(var + LN_EPS) * gamma + beta


def _round_up(n, m):
    return ((n + m - 1) // m) * m


# ----------------------------- kernel ----------------------------------------
def _make_kernel(D, H0, H1):
    # Parameter-table row layout (width = max(D, H0, H1), zero padded):
    #   0: gamma_in  1: beta_in
    #   2: b0        3: gamma0    4: beta0
    #   5: b1        6: gamma1    7: beta1
    #   8: w_final (row vector)   9: b_final in column 0
    def kernel(x_ref, tbl_ref, w01_ref, posw_ref, out_ref):
        x = x_ref[...]
        tbl = tbl_ref[...]

        gin, bin_ = tbl[0:1, :D], tbl[1:2, :D]
        b0, g0, bt0 = tbl[2:3, :H0], tbl[3:4, :H0], tbl[4:5, :H0]
        b1, g1, bt1 = tbl[5:6, :H1], tbl[6:7, :H1], tbl[7:8, :H1]
        wf = tbl[8:9, :H1]
        bf = tbl[9:10, 0:1]

        # input_norm
        xn = _layernorm(x, gin, bin_)

        # fused x-path matmul for both convex layers: (TB, D) @ (D, H0+H1)
        y01 = jnp.dot(xn, w01_ref[...], preferred_element_type=jnp.float32)

        # ---- ConvexLayer 0 (z is None) ----
        z0 = _softplus(_layernorm(y01[:, :H0] + b0, g0, bt0))

        # ---- ConvexLayer 1 (convex z-path; pos-weights already softplus'd
        #      and scaled in the wrapper — batch independent) ----
        y1 = y01[:, H0:H0 + H1] + b1 + jnp.dot(
            z0, posw_ref[...], preferred_element_type=jnp.float32)
        # TODO(synk): training-only gradient_clip rescale of z_contrib is skipped (eval mode).
        z1 = _softplus(_layernorm(y1, g1, bt1))

        # ---- final Linear(H1, 1): VPU multiply + cross-lane (XLU) reduction,
        #      avoiding a wasted N=1 MXU pass ----
        out_ref[...] = jnp.sum(z1 * wf, axis=-1, keepdims=True) + bf

    return kernel


# ----------------------------- wrapper ----------------------------------------
def single_cell_icnn(x, params, *, tile_b=None):
    B, D = x.shape
    (gin, bin_, w0t, b0, g0, bt0, w1t, b1, pw1t, s1, g1, bt1, wft, bf) = params
    H0, H1 = w0t.shape[1], w1t.shape[1]
    assert w1t.shape[0] == D and H0 == D, (
        "PyTorch forward feeds the normalized input to every layer's linear")

    # ---- batch-independent precompute, hoisted out of the kernel grid loop ----
    posw = _softplus(pw1t + CFG_EPS) * s1[0, 0]          # (H0, H1)
    w01 = jnp.concatenate([w0t, w1t], axis=1)            # (D, H0 + H1)

    W = max(D, H0, H1)

    def row(v, n):
        return jnp.pad(jnp.reshape(v, (1, n)).astype(jnp.float32),
                       ((0, 0), (0, W - n)))

    tbl = jnp.concatenate([
        row(gin, D), row(bin_, D),
        row(b0, H0), row(g0, H0), row(bt0, H0),
        row(b1, H1), row(g1, H1), row(bt1, H1),
        row(wft, H1),
        row(bf, 1),
    ], axis=0)                                            # (10, W)

    # ---- tile selection: per-grid-step overhead is ~0.35 us, so use big tiles,
    #      but keep >= 2 grid steps when possible so both v7x TensorCores get
    #      work via dimension_semantics=("parallel",). ----
    if tile_b is None:
        if B <= 8:
            tile_b = 8
        else:
            tile_b = min(1024, _round_up(-(-B // 2), 8))
    Bp = _round_up(B, tile_b)
    xp = jnp.pad(x, ((0, Bp - B), (0, 0))) if Bp != B else x

    kernel = _make_kernel(D, H0, H1)

    # Advisory cost estimate for the XLA scheduler.
    flops = 2 * Bp * D * (H0 + H1) + 2 * Bp * H0 * H1 + 10 * Bp * (D + H0 + H1)
    transcendentals = Bp * (2 * (H0 + H1) + 3)            # exp+log1p per softplus, rsqrt per LN
    bytes_accessed = (Bp * D + Bp) * 4 + (tbl.size + w01.size + posw.size) * 4

    out = pl.pallas_call(
        kernel,
        out_shape=jax.ShapeDtypeStruct((Bp, 1), jnp.float32),
        grid=(Bp // tile_b,),
        in_specs=[
            pl.BlockSpec((tile_b, D), lambda i: (i, 0)),   # x tile
            pl.BlockSpec(tbl.shape, lambda i: (0, 0)),     # consolidated params (fetched once)
            pl.BlockSpec(w01.shape, lambda i: (0, 0)),     # fused x-path weights (fetched once)
            pl.BlockSpec(posw.shape, lambda i: (0, 0)),    # scaled positive weights (fetched once)
        ],
        out_specs=pl.BlockSpec((tile_b, 1), lambda i: (i, 0)),
        compiler_params=pltpu.CompilerParams(dimension_semantics=("parallel",)),
        cost_estimate=pl.CostEstimate(flops=flops,
                                      transcendentals=transcendentals,
                                      bytes_accessed=bytes_accessed),
    )(xp, tbl, w01, posw)

    return out[:B]


# ------------------------ deterministic parameter init ------------------------
def make_params(key):
    D = INPUT_DIM
    H0, H1 = HIDDEN_DIMS
    ks = jax.random.split(key, 8)

    def ortho(k, shape):
        a = jax.random.normal(k, (max(shape), max(shape)), jnp.float32)
        q, _ = jnp.linalg.qr(a)
        return q[: shape[0], : shape[1]]

    # input LayerNorm (affine, default init gamma=1, beta=0)
    gin = jnp.ones((1, D), jnp.float32)
    bin_ = jnp.zeros((1, D), jnp.float32)

    # layer 0: Linear(D, H0) orthogonal weight, uniform bias; LN affine defaults
    w0 = ortho(ks[0], (H0, D))
    b0 = jax.random.uniform(ks[1], (1, H0), jnp.float32,
                            -1.0 / math.sqrt(D), 1.0 / math.sqrt(D))
    g0, bt0 = jnp.ones((1, H0), jnp.float32), jnp.zeros((1, H0), jnp.float32)

    # layer 1: Linear(H0, H1), pos_weights init to zeros, scale = init_scale
    w1 = ortho(ks[2], (H1, H0))
    b1 = jax.random.uniform(ks[3], (1, H1), jnp.float32,
                            -1.0 / math.sqrt(H0), 1.0 / math.sqrt(H0))
    pw1 = jnp.zeros((H1, H0), jnp.float32)
    s1 = jnp.full((1, 1), INIT_SCALE, jnp.float32)
    g1, bt1 = jnp.ones((1, H1), jnp.float32), jnp.zeros((1, H1), jnp.float32)

    # final Linear(H1, 1): default PyTorch init ~ U(-1/sqrt(H1), 1/sqrt(H1))
    wf = jax.random.uniform(ks[4], (1, H1), jnp.float32,
                            -1.0 / math.sqrt(H1), 1.0 / math.sqrt(H1))
    bf = jax.random.uniform(ks[5], (1, 1), jnp.float32,
                            -1.0 / math.sqrt(H1), 1.0 / math.sqrt(H1))

    # pre-transpose all matmul weights to (in, out) for the kernel
    return (gin, bin_, w0.T, b0, g0, bt0, w1.T, b1, pw1.T, s1, g1, bt1, wf.T, bf)


# ------------------------------ pure-JAX reference -----------------------------
def reference(x, params):
    (gin, bin_, w0t, b0, g0, bt0, w1t, b1, pw1t, s1, g1, bt1, wft, bf) = params
    xn = _layernorm(x, gin, bin_)
    z0 = _softplus(_layernorm(xn @ w0t + b0, g0, bt0))
    pos_w = _softplus(pw1t + CFG_EPS)
    y1 = xn @ w1t + b1 + (z0 @ pos_w) * s1[0, 0]
    z1 = _softplus(_layernorm(y1, g1, bt1))
    return z1 @ wft + bf


# ----------------------------------- main --------------------------------------
if __name__ == "__main__":
    key = jax.random.PRNGKey(0)
    kx, kp = jax.random.split(key)

    params = make_params(kp)

    # primary check: batch that tiles evenly (grid of 2 -> both v7x TCs exercised)
    B = 16
    x = jax.random.normal(kx, (B, INPUT_DIM), jnp.float32)
    out = jax.block_until_ready(single_cell_icnn(x, params))
    ref = reference(x, params)
    assert out.shape == (B, 1)
    assert jnp.allclose(out, ref, atol=2e-5, rtol=1e-5), (out, ref)

    # secondary check: ragged batch exercises the wrapper-side padding path
    B2 = 13
    x2 = jax.random.normal(jax.random.fold_in(kx, 1), (B2, INPUT_DIM), jnp.float32)
    out2 = jax.block_until_ready(single_cell_icnn(x2, params))
    ref2 = reference(x2, params)
    assert out2.shape == (B2, 1)
    assert jnp.allclose(out2, ref2, atol=2e-5, rtol=1e-5), (out2, ref2)

    print("KERNEL_OK")
</pallas_src>

<mosaic_0001>
module attributes {stable_mosaic.version = 11 : i64} {
  func.func @kernel(%arg0: i32, %arg1: memref<8x32xf32, #tpu.memory_space<vmem>>, %arg2: memref<10x32xf32, #tpu.memory_space<vmem>>, %arg3: memref<32x64xf32, #tpu.memory_space<vmem>>, %arg4: memref<32x32xf32, #tpu.memory_space<vmem>>, %arg5: memref<8x1xf32, #tpu.memory_space<vmem>>) attributes {dimension_semantics = [#tpu.dimension_semantics<parallel>], iteration_bounds = array<i64: 2>, scalar_prefetch = 0 : i64, scratch_operands = 0 : i64, tpu.core_type = #tpu.core_type<tc>, window_params = [{transform_indices = @transform_0, window_bounds = array<i64: 8, 32>}, {pipeline_mode = #tpu.pipeline_mode<synchronous>, transform_indices = @transform_1, window_bounds = array<i64: 10, 32>}, {pipeline_mode = #tpu.pipeline_mode<synchronous>, transform_indices = @transform_2, window_bounds = array<i64: 32, 64>}, {pipeline_mode = #tpu.pipeline_mode<synchronous>, transform_indices = @transform_3, window_bounds = array<i64: 32, 32>}, {transform_indices = @transform_4, window_bounds = array<i64: 8, 1>}]} {
    %c0 = arith.constant 0 : index
    %c0_0 = arith.constant 0 : index
    %0 = vector.load %arg1[%c0, %c0_0] : memref<8x32xf32, #tpu.memory_space<vmem>>, vector<8x32xf32>
    %c0_1 = arith.constant 0 : index
    %c0_2 = arith.constant 0 : index
    %1 = vector.load %arg2[%c0_1, %c0_2] : memref<10x32xf32, #tpu.memory_space<vmem>>, vector<10x32xf32>
    %2 = vector.extract_strided_slice %1 {offsets = [0, 0], sizes = [1, 32], strides = [1, 1]} : vector<10x32xf32> to vector<1x32xf32>
    %3 = vector.extract_strided_slice %1 {offsets = [1, 0], sizes = [1, 32], strides = [1, 1]} : vector<10x32xf32> to vector<1x32xf32>
    %4 = vector.extract_strided_slice %1 {offsets = [2, 0], sizes = [1, 32], strides = [1, 1]} : vector<10x32xf32> to vector<1x32xf32>
    %5 = vector.extract_strided_slice %1 {offsets = [3, 0], sizes = [1, 32], strides = [1, 1]} : vector<10x32xf32> to vector<1x32xf32>
    %6 = vector.extract_strided_slice %1 {offsets = [4, 0], sizes = [1, 32], strides = [1, 1]} : vector<10x32xf32> to vector<1x32xf32>
    %7 = vector.extract_strided_slice %1 {offsets = [5, 0], sizes = [1, 32], strides = [1, 1]} : vector<10x32xf32> to vector<1x32xf32>
    %8 = vector.extract_strided_slice %1 {offsets = [6, 0], sizes = [1, 32], strides = [1, 1]} : vector<10x32xf32> to vector<1x32xf32>
    %9 = vector.extract_strided_slice %1 {offsets = [7, 0], sizes = [1, 32], strides = [1, 1]} : vector<10x32xf32> to vector<1x32xf32>
    %10 = vector.extract_strided_slice %1 {offsets = [8, 0], sizes = [1, 32], strides = [1, 1]} : vector<10x32xf32> to vector<1x32xf32>
    %11 = vector.extract_strided_slice %1 {offsets = [9, 0], sizes = [1, 1], strides = [1, 1]} : vector<10x32xf32> to vector<1x1xf32>
    %cst = arith.constant dense<0.000000e+00> : vector<8xf32>
    %12 = vector.multi_reduction <add>, %0, %cst [1] : vector<8x32xf32> to vector<8xf32>
    %13 = vector.shape_cast %12 : vector<8xf32> to vector<8x1xf32>
    %cst_3 = arith.constant 3.200000e+01 : f32
    %14 = vector.broadcast %cst_3 : f32 to vector<8x1xf32>
    %15 = arith.divf %13, %14 : vector<8x1xf32>
    %16 = vector.broadcast %15 : vector<8x1xf32> to vector<8x32xf32>
    %17 = arith.subf %0, %16 : vector<8x32xf32>
    %18 = arith.mulf %17, %17 : vector<8x32xf32>
    %cst_4 = arith.constant dense<0.000000e+00> : vector<8xf32>
    %19 = vector.multi_reduction <add>, %18, %cst_4 [1] : vector<8x32xf32> to vector<8xf32>
    %20 = vector.shape_cast %19 : vector<8xf32> to vector<8x1xf32>
    %cst_5 = arith.constant 3.200000e+01 : f32
    %21 = vector.broadcast %cst_5 : f32 to vector<8x1xf32>
    %22 = arith.divf %20, %21 : vector<8x1xf32>
    %23 = vector.broadcast %15 : vector<8x1xf32> to vector<8x32xf32>
    %24 = arith.subf %0, %23 : vector<8x32xf32>
    %cst_6 = arith.constant 9.99999974E-6 : f32
    %25 = vector.broadcast %cst_6 : f32 to vector<8x1xf32>
    %26 = arith.addf %22, %25 : vector<8x1xf32>
    %27 = math.rsqrt %26 : vector<8x1xf32>
    %28 = vector.broadcast %27 : vector<8x1xf32> to vector<8x32xf32>
    %29 = arith.mulf %24, %28 : vector<8x32xf32>
    %30 = vector.broadcast %2 : vector<1x32xf32> to vector<8x32xf32>
    %31 = arith.mulf %29, %30 : vector<8x32xf32>
    %32 = vector.broadcast %3 : vector<1x32xf32> to vector<8x32xf32>
    %33 = arith.addf %31, %32 : vector<8x32xf32>
    %c0_7 = arith.constant 0 : index
    %c0_8 = arith.constant 0 : index
    %34 = vector.load %arg3[%c0_7, %c0_8] : memref<32x64xf32, #tpu.memory_space<vmem>>, vector<32x64xf32>
    %cst_9 = arith.constant dense<0.000000e+00> : vector<8x64xf32>
    %35 = tpu.matmul %33, %34, %cst_9 {dimension_numbers = #tpu.dot_dimension_numbers<[1], [0], [0], [1], [0, 0, 1, 1], [], []>} : vector<8x32xf32>, vector<32x64xf32>, vector<8x64xf32> -> vector<8x64xf32>
    %36 = vector.extract_strided_slice %35 {offsets = [0, 0], sizes = [8, 32], strides = [1, 1]} : vector<8x64xf32> to vector<8x32xf32>
    %37 = vector.broadcast %4 : vector<1x32xf32> to vector<8x32xf32>
    %38 = arith.addf %36, %37 : vector<8x32xf32>
    %cst_10 = arith.constant dense<0.000000e+00> : vector<8xf32>
    %39 = vector.multi_reduction <add>, %38, %cst_10 [1] : vector<8x32xf32> to vector<8xf32>
    %40 = vector.shape_cast %39 : vector<8xf32> to vector<8x1xf32>
    %cst_11 = arith.constant 3.200000e+01 : f32
    %41 = vector.broadcast %cst_11 : f32 to vector<8x1xf32>
    %42 = arith.divf %40, %41 : vector<8x1xf32>
    %43 = vector.broadcast %42 : vector<8x1xf32> to vector<8x32xf32>
    %44 = arith.subf %38, %43 : vector<8x32xf32>
    %45 = arith.mulf %44, %44 : vector<8x32xf32>
    %cst_12 = arith.constant dense<0.000000e+00> : vector<8xf32>
    %46 = vector.multi_reduction <add>, %45, %cst_12 [1] : vector<8x32xf32> to vector<8xf32>
    %47 = vector.shape_cast %46 : vector<8xf32> to vector<8x1xf32>
    %cst_13 = arith.constant 3.200000e+01 : f32
    %48 = vector.broadcast %cst_13 : f32 to vector<8x1xf32>
    %49 = arith.divf %47, %48 : vector<8x1xf32>
    %50 = vector.broadcast %42 : vector<8x1xf32> to vector<8x32xf32>
    %51 = arith.subf %38, %50 : vector<8x32xf32>
    %cst_14 = arith.constant 9.99999974E-6 : f32
    %52 = vector.broadcast %cst_14 : f32 to vector<8x1xf32>
    %53 = arith.addf %49, %52 : vector<8x1xf32>
    %54 = math.rsqrt %53 : vector<8x1xf32>
    %55 = vector.broadcast %54 : vector<8x1xf32> to vector<8x32xf32>
    %56 = arith.mulf %51, %55 : vector<8x32xf32>
    %57 = vector.broadcast %5 : vector<1x32xf32> to vector<8x32xf32>
    %58 = arith.mulf %56, %57 : vector<8x32xf32>
    %59 = vector.broadcast %6 : vector<1x32xf32> to vector<8x32xf32>
    %60 = arith.addf %58, %59 : vector<8x32xf32>
    %cst_15 = arith.constant 2.000000e+01 : f32
    %61 = vector.broadcast %cst_15 : f32 to vector<8x32xf32>
    %62 = arith.cmpf ogt, %60, %61 : vector<8x32xf32>
    %cst_16 = arith.constant 2.000000e+01 : f32
    %63 = vector.broadcast %cst_16 : f32 to vector<8x32xf32>
    %64 = arith.minimumf %60, %63 : vector<8x32xf32>
    %65 = math.exp %64 : vector<8x32xf32>
    %66 = math.log1p %65 : vector<8x32xf32>
    %67 = arith.select %62, %60, %66 : vector<8x32xi1>, vector<8x32xf32>
    %68 = vector.extract_strided_slice %35 {offsets = [0, 32], sizes = [8, 32], strides = [1, 1]} : vector<8x64xf32> to vector<8x32xf32>
    %69 = vector.broadcast %7 : vector<1x32xf32> to vector<8x32xf32>
    %70 = arith.addf %68, %69 : vector<8x32xf32>
    %c0_17 = arith.constant 0 : index
    %c0_18 = arith.constant 0 : index
    %71 = vector.load %arg4[%c0_17, %c0_18] : memref<32x32xf32, #tpu.memory_space<vmem>>, vector<32x32xf32>
    %cst_19 = arith.constant dense<0.000000e+00> : vector<8x32xf32>
    %72 = tpu.matmul %67, %71, %cst_19 {dimension_numbers = #tpu.dot_dimension_numbers<[1], [0], [0], [1], [0, 0, 1, 1], [], []>} : vector<8x32xf32>, vector<32x32xf32>, vector<8x32xf32> -> vector<8x32xf32>
    %73 = arith.addf %70, %72 : vector<8x32xf32>
    %cst_20 = arith.constant dense<0.000000e+00> : vector<8xf32>
    %74 = vector.multi_reduction <add>, %73, %cst_20 [1] : vector<8x32xf32> to vector<8xf32>
    %75 = vector.shape_cast %74 : vector<8xf32> to vector<8x1xf32>
    %cst_21 = arith.constant 3.200000e+01 : f32
    %76 = vector.broadcast %cst_21 : f32 to vector<8x1xf32>
    %77 = arith.divf %75, %76 : vector<8x1xf32>
    %78 = vector.broadcast %77 : vector<8x1xf32> to vector<8x32xf32>
    %79 = arith.subf %73, %78 : vector<8x32xf32>
    %80 = arith.mulf %79, %79 : vector<8x32xf32>
    %cst_22 = arith.constant dense<0.000000e+00> : vector<8xf32>
    %81 = vector.multi_reduction <add>, %80, %cst_22 [1] : vector<8x32xf32> to vector<8xf32>
    %82 = vector.shape_cast %81 : vector<8xf32> to vector<8x1xf32>
    %cst_23 = arith.constant 3.200000e+01 : f32
    %83 = vector.broadcast %cst_23 : f32 to vector<8x1xf32>
    %84 = arith.divf %82, %83 : vector<8x1xf32>
    %85 = vector.broadcast %77 : vector<8x1xf32> to vector<8x32xf32>
    %86 = arith.subf %73, %85 : vector<8x32xf32>
    %cst_24 = arith.constant 9.99999974E-6 : f32
    %87 = vector.broadcast %cst_24 : f32 to vector<8x1xf32>
    %88 = arith.addf %84, %87 : vector<8x1xf32>
    %89 = math.rsqrt %88 : vector<8x1xf32>
    %90 = vector.broadcast %89 : vector<8x1xf32> to vector<8x32xf32>
    %91 = arith.mulf %86, %90 : vector<8x32xf32>
    %92 = vector.broadcast %8 : vector<1x32xf32> to vector<8x32xf32>
    %93 = arith.mulf %91, %92 : vector<8x32xf32>
    %94 = vector.broadcast %9 : vector<1x32xf32> to vector<8x32xf32>
    %95 = arith.addf %93, %94 : vector<8x32xf32>
    %cst_25 = arith.constant 2.000000e+01 : f32
    %96 = vector.broadcast %cst_25 : f32 to vector<8x32xf32>
    %97 = arith.cmpf ogt, %95, %96 : vector<8x32xf32>
    %cst_26 = arith.constant 2.000000e+01 : f32
    %98 = vector.broadcast %cst_26 : f32 to vector<8x32xf32>
    %99 = arith.minimumf %95, %98 : vector<8x32xf32>
    %100 = math.exp %99 : vector<8x32xf32>
    %101 = math.log1p %100 : vector<8x32xf32>
    %102 = arith.select %97, %95, %101 : vector<8x32xi1>, vector<8x32xf32>
    %103 = vector.broadcast %10 : vector<1x32xf32> to vector<8x32xf32>
    %104 = arith.mulf %102, %103 : vector<8x32xf32>
    %cst_27 = arith.constant dense<0.000000e+00> : vector<8xf32>
    %105 = vector.multi_reduction <add>, %104, %cst_27 [1] : vector<8x32xf32> to vector<8xf32>
    %106 = vector.shape_cast %105 : vector<8xf32> to vector<8x1xf32>
    %107 = vector.broadcast %11 : vector<1x1xf32> to vector<8x1xf32>
    %108 = arith.addf %106, %107 : vector<8x1xf32>
    %c0_28 = arith.constant 0 : index
    %c0_29 = arith.constant 0 : index
    %109 = vector.load %arg5[%c0_28, %c0_29] : memref<8x1xf32, #tpu.memory_space<vmem>>, vector<8x1xf32>
    tpu.vector_store %arg5[%c0_28, %c0_29], %108 {strides = array<i32>} : memref<8x1xf32, #tpu.memory_space<vmem>>, vector<8x1xf32>,
    return
  }
  func.func @transform_0(%arg0: i32) -> (i32, i32) {
    %c0_i32 = arith.constant 0 : i32
    %c0_i32_0 = arith.constant 0 : i32
    return %arg0, %c0_i32 : i32, i32
  }
  func.func @transform_1(%arg0: i32) -> (i32, i32) {
    %c0_i32 = arith.constant 0 : i32
    %c0_i32_0 = arith.constant 0 : i32
    %c0_i32_1 = arith.constant 0 : i32
    return %c0_i32, %c0_i32_0 : i32, i32
  }
  func.func @transform_2(%arg0: i32) -> (i32, i32) {
    %c0_i32 = arith.constant 0 : i32
    %c0_i32_0 = arith.constant 0 : i32
    %c0_i32_1 = arith.constant 0 : i32
    return %c0_i32, %c0_i32_0 : i32, i32
  }
  func.func @transform_3(%arg0: i32) -> (i32, i32) {
    %c0_i32 = arith.constant 0 : i32
    %c0_i32_0 = arith.constant 0 : i32
    %c0_i32_1 = arith.constant 0 : i32
    return %c0_i32, %c0_i32_0 : i32, i32
  }
  func.func @transform_4(%arg0: i32) -> (i32, i32) {
    %c0_i32 = arith.constant 0 : i32
    %c0_i32_0 = arith.constant 0 : i32
    return %arg0, %c0_i32 : i32, i32
  }
}

</mosaic_0001>

<llo_original>
// kernel: tpu_custom_call.1
$region0: #{tpu_custom_call.1}
  #allocation0 [shape = 'u32[]', space=smem, size = 0x4, offset = 0x4, fixed_abs, tag = 'smem constant byte address 0x4 - core index']
  #allocation1 [shape = 'u32[144,128]{1,0:T(1,128)}', space=vmem, size = 0x12000, scoped, tag = 'internal scratch']
  %s0 = inlined_call_operand.hbm [shape: f32[16,32], index: 0, kind: input, shape index: {}]
  %s1 = inlined_call_operand.hbm [shape: f32[10,32], index: 1, kind: input, shape index: {}]
  %s2 = inlined_call_operand.hbm [shape: f32[32,64], index: 2, kind: input, shape index: {}]
  %s3 = inlined_call_operand.hbm [shape: f32[32,32], index: 3, kind: input, shape index: {}]
  %s4 = inlined_call_operand.vmem [shape: f32[16,1], index: 4, kind: output, shape index: {}]
  %s5 = sld [smem:[#allocation0]]
  $region65: #{tpu_custom_call.1} parent=0
    _
  %s7 = ssub.s32 1, %s5
  %s8 = scalar_select 0, %s7, %s5
  $region1: #{tpu_custom_call.1} parent=0
    #allocation2 [shape = 'u8[8192]{0}', space=vmem, size = 0x2000, scoped, tag = 'input window, operand 0']
    #allocation3 [shape = 's32[2]{0}', space=sflag, size = 0x8, scoped, tag = 'scoped memory for tpu_custom_call.1']
    #allocation4 [shape = 'u8[8192]{0}', space=vmem, size = 0x2000, scoped, tag = 'input window, operand 1, single buffered']
    #allocation5 [shape = 's32[1]{0}', space=sflag, size = 0x4, scoped, tag = 'scoped memory for tpu_custom_call.1']
    #allocation6 [shape = 'u8[16384]{0}', space=vmem, size = 0x4000, scoped, tag = 'input window, operand 2, single buffered']
    #allocation7 [shape = 'u8[16384]{0}', space=vmem, size = 0x4000, scoped, tag = 'input window, operand 3, single buffered']
    #allocation8 [shape = 's32[1]{0}', space=sflag, size = 0x4, scoped, tag = 'scoped memory for tpu_custom_call.1']
    %9 = vsyncpa [#allocation3], 0
    %s10 = scalar_lea.sflag [#allocation3], 1
    %11 = vsyncpa %s10, 0
    %12 = vsyncpa [#allocation5], 0
    %13 = vsyncpa [#allocation8], 0
    loop: start=0, step=1, limit=4
    $region2: #{tpu_custom_call.1} parent=1 // loop_pre_header
      _
    $region3: #{tpu_custom_call.1} parent=1 // loop_header
      %s15 = sphi 0, %s19
      %p16 = scmp.ge.s32.totalorder %s15, 4
      %s25 = sphi 0, %s27
      %s28 = sphi 0, %s25
      %s29 = sphi 0, %s28
      %s45 = sphi 0, %s29
      %s49 = sphi 0, %s49
      %s51 = sphi 0, %s49
      %s52 = sphi 0, %s51
      %s66 = sphi 0, %s52
      %s70 = sphi 0, %s70
      %s72 = sphi 0, %s70
      %s73 = sphi 0, %s72
      %s87 = sphi 0, %s73
      %s91 = sphi 0, %s91
      %s93 = sphi 0, %s91
      %s94 = sphi 0, %s93
      %s108 = sphi 0, %s94
      %s114 = sphi 0, %s116
      %s117 = sphi 0, %s114
      %s118 = sphi 0, %s117
      %s134 = sphi 0, %s118
    $region4: #{tpu_custom_call.1} parent=1 // loop_header_branch
      %18 = sbr.rel (%p16) target = $region8
    $region5: #{tpu_custom_call.1} parent=1 // loop_body
      %s20 = ssub.s32 %s15, 1
      %s21 = ssub.s32 %s15, 2
      %s22 = sadd.s32 %s15, 1
      %s23 = ssub.s32 %s15, %s22
      %p24 = scmp.eq.s32.totalorder %s23, 0
      %s26 = sadd.s32 %s25, 1
      %s27 = scalar_select %p24, %s25, %s26
      %p30 = pneg %p24
      %p31 = scmp.eq.s32.totalorder %s15, 1
      %p32 = por %p30, %p31
      %p33 = scmp.ne.s32.totalorder %s25, %s28
      %p34 = scmp.eq.s32.totalorder %s15, 0
      %p35 = por %p33, %p34
      %p36 = scmp.ne.s32.totalorder %s25, %s28
      %p37 = scmp.eq.s32.totalorder %s20, 1
      %p38 = por %p36, %p37
      %p39 = scmp.ne.s32.totalorder %s28, %s29
      %p40 = scmp.eq.s32.totalorder %s20, 0
      %p41 = por %p39, %p40
      %p42 = scmp.ne.s32.totalorder %s28, %s29
      %p43 = scmp.eq.s32.totalorder %s21, 1
      %p44 = por %p42, %p43
      %p46 = scmp.ne.s32.totalorder %s29, %s45
      %p47 = scmp.eq.s32.totalorder %s21, 0
      %p48 = por %p46, %p47
      %s50 = sadd.s32 %s49, 1
      %p53 = scmp.eq.s32.totalorder %s15, 1
      %p54 = scmp.ne.s32.totalorder %s49, %s51
      %p55 = scmp.eq.s32.totalorder %s15, 0
      %p56 = por %p54, %p55
      %p57 = scmp.ne.s32.totalorder %s49, %s51
      %p58 = scmp.eq.s32.totalorder %s20, 1
      %p59 = por %p57, %p58
      %p60 = scmp.ne.s32.totalorder %s51, %s52
      %p61 = scmp.eq.s32.totalorder %s20, 0
      %p62 = por %p60, %p61
      %p63 = scmp.ne.s32.totalorder %s51, %s52
      %p64 = scmp.eq.s32.totalorder %s21, 1
      %p65 = por %p63, %p64
      %p67 = scmp.ne.s32.totalorder %s52, %s66
      %p68 = scmp.eq.s32.totalorder %s21, 0
      %p69 = por %p67, %p68
      %s71 = sadd.s32 %s70, 1
      %p74 = scmp.eq.s32.totalorder %s15, 1
      %p75 = scmp.ne.s32.totalorder %s70, %s72
      %p76 = scmp.eq.s32.totalorder %s15, 0
      %p77 = por %p75, %p76
      %p78 = scmp.ne.s32.totalorder %s70, %s72
      %p79 = scmp.eq.s32.totalorder %s20, 1
      %p80 = por %p78, %p79
      %p81 = scmp.ne.s32.totalorder %s72, %s73
      %p82 = scmp.eq.s32.totalorder %s20, 0
      %p83 = por %p81, %p82
      %p84 = scmp.ne.s32.totalorder %s72, %s73
      %p85 = scmp.eq.s32.totalorder %s21, 1
      %p86 = por %p84, %p85
      %p88 = scmp.ne.s32.totalorder %s73, %s87
      %p89 = scmp.eq.s32.totalorder %s21, 0
      %p90 = por %p88, %p89
      %s92 = sadd.s32 %s91, 1
      %p95 = scmp.eq.s32.totalorder %s15, 1
      %p96 = scmp.ne.s32.totalorder %s91, %s93
      %p97 = scmp.eq.s32.totalorder %s15, 0
      %p98 = por %p96, %p97
      %p99 = scmp.ne.s32.totalorder %s91, %s93
      %p100 = scmp.eq.s32.totalorder %s20, 1
      %p101 = por %p99, %p100
      %p102 = scmp.ne.s32.totalorder %s93, %s94
      %p103 = scmp.eq.s32.totalorder %s20, 0
      %p104 = por %p102, %p103
      %p105 = scmp.ne.s32.totalorder %s93, %s94
      %p106 = scmp.eq.s32.totalorder %s21, 1
      %p107 = por %p105, %p106
      %p109 = scmp.ne.s32.totalorder %s94, %s108
      %p110 = scmp.eq.s32.totalorder %s21, 0
      %p111 = por %p109, %p110
      %s112 = ssub.s32 %s15, %s22
      %p113 = scmp.eq.s32.totalorder %s112, 0
      %s115 = sadd.s32 %s114, 1
      %s116 = scalar_select %p113, %s114, %s115
      %p119 = pneg %p113
      %p120 = scmp.eq.s32.totalorder %s15, 1
      %p121 = por %p119, %p120
      %p122 = scmp.ne.s32.totalorder %s114, %s117
      %p123 = scmp.eq.s32.totalorder %s15, 0
      %p124 = por %p122, %p123
      %p125 = scmp.ne.s32.totalorder %s114, %s117
      %p126 = scmp.eq.s32.totalorder %s20, 1
      %p127 = por %p125, %p126
      %p128 = scmp.ne.s32.totalorder %s117, %s118
      %p129 = scmp.eq.s32.totalorder %s20, 0
      %p130 = por %p128, %p129
      %p131 = scmp.ne.s32.totalorder %s117, %s118
      %p132 = scmp.eq.s32.totalorder %s21, 1
      %p133 = por %p131, %p132
      %p135 = scmp.ne.s32.totalorder %s118, %s134
      %p136 = scmp.eq.s32.totalorder %s21, 0
      %p137 = por %p135, %p136
      %p138 = scmp.le.s32.totalorder 1, %s15
      %p139 = scmp.lt.s32.totalorder %s15, 3
      %p140 = pnand %p138, %p139
      %p141 = pneg %p140
      // Predicated region
      $region9: #{tpu_custom_call.1} parent=5 // pred_check
        _
      $region10: #{tpu_custom_call.1} parent=5 // pred_check_branch
        %143 = sbr.rel (%p140) target = $region12
      $region11: #{tpu_custom_call.1} parent=5 // pred_region
        %s144 = ssub.s32 %s15, 1
        // Predicated region
        $region13: #{tpu_custom_call.1} parent=11 // pred_check
          %p145 = pneg %p62
        $region14: #{tpu_custom_call.1} parent=11 // pred_check_branch
          %147 = sbr.rel (%p145) target = $region16
        $region15: #{tpu_custom_call.1} parent=11 // pred_region
          %s149 = ssub.s32 256, 256
          %150 = vsyncadd [#allocation5], %s149
          %s151 = sshll.u32 [#allocation4], 4
          %s152 = int_to_ptr.vmem [resolvable:$true] %s151
          %157 = dma.hbm_to_vmem [thread:$0]  %s1, 256, %s152, [#allocation5], 128, 128, 8
        $region16: #{tpu_custom_call.1} parent=11 // pred_fallthru
          _
        // Predicated region
        $region17: #{tpu_custom_call.1} parent=11 // pred_check
          %p158 = pneg %p83
        $region18: #{tpu_custom_call.1} parent=11 // pred_check_branch
          %160 = sbr.rel (%p158) target = $region20
        $region19: #{tpu_custom_call.1} parent=11 // pred_region
          %s162 = ssub.s32 512, 512
          %163 = vsyncadd [#allocation5], %s162
          %s164 = sshll.u32 [#allocation6], 4
          %s165 = int_to_ptr.vmem [resolvable:$true] %s164
          %170 = dma.hbm_to_vmem [thread:$0]  %s2, 512, %s165, [#allocation5], 128, 128, 8
        $region20: #{tpu_custom_call.1} parent=11 // pred_fallthru
          _
        // Predicated region
        $region21: #{tpu_custom_call.1} parent=11 // pred_check
          %p171 = pneg %p104
        $region22: #{tpu_custom_call.1} parent=11 // pred_check_branch
          %173 = sbr.rel (%p171) target = $region24
        $region23: #{tpu_custom_call.1} parent=11 // pred_region
          %s175 = ssub.s32 512, 512
          %176 = vsyncadd [#allocation8], %s175
          %s177 = sshll.u32 [#allocation7], 4
          %s178 = int_to_ptr.vmem [resolvable:$true] %s177
          %183 = dma.hbm_to_vmem [thread:$0]  %s3, 512, %s178, [#allocation8], 128, 128, 8
        $region24: #{tpu_custom_call.1} parent=11 // pred_fallthru
          _
      $region12: #{tpu_custom_call.1} parent=5 // pred_fallthru
        _
      %p184 = scmp.lt.s32.totalorder %s15, 2
      // Predicated region
      $region25: #{tpu_custom_call.1} parent=5 // pred_check
        %p185 = pneg %p184
      $region26: #{tpu_custom_call.1} parent=5 // pred_check_branch
        %187 = sbr.rel (%p185) target = $region28
      $region27: #{tpu_custom_call.1} parent=5 // pred_region
        // Predicated region
        $region29: #{tpu_custom_call.1} parent=27 // pred_check
          %p188 = pneg %p35
        $region30: #{tpu_custom_call.1} parent=27 // pred_check_branch
          %190 = sbr.rel (%p188) target = $region32
        $region31: #{tpu_custom_call.1} parent=27 // pred_region
          %s191 = sand.u32 %s25, 1
          %s192 = scalar_lea.sflag [#allocation3], %s191
          %s193 = sand.u32 %s25, 1
          %s194 = smul.addr %s193, 8
          %s195 = scalar_lea.vmem [#allocation2], %s194
          %s197 = ssub.s32 128, 128
          %198 = vsyncadd %s192, %s197
          %s199 = smul.addr %s15, 128
          %s200 = scalar_lea.hbm %s0, %s199
          %s202 = sshll.u32 %s195, 4
          %s203 = int_to_ptr.vmem [resolvable:$true] %s202
          %205 = dma.hbm_to_vmem [thread:$0]  %s200, 128, %s203, %s192
        $region32: #{tpu_custom_call.1} parent=27 // pred_fallthru
          _
      $region28: #{tpu_custom_call.1} parent=5 // pred_fallthru
        _
      %p206 = scmp.le.s32.totalorder 1, %s15
      %p207 = scmp.lt.s32.totalorder %s15, 3
      %p208 = pnand %p206, %p207
      %p209 = pneg %p208
      // Predicated region
      $region33: #{tpu_custom_call.1} parent=5 // pred_check
        _
      $region34: #{tpu_custom_call.1} parent=5 // pred_check_branch
        %211 = sbr.rel (%p208) target = $region36
      $region35: #{tpu_custom_call.1} parent=5 // pred_region
        %s212 = ssub.s32 %s15, 1
        %s213 = sand.u32 %s28, 1
        %s214 = scalar_lea.sflag [#allocation3], %s213
        %s215 = sand.u32 %s28, 1
        %s216 = smul.addr %s215, 8
        %s217 = scalar_lea.vmem [#allocation2], %s216
        // Predicated region
        $region37: #{tpu_custom_call.1} parent=35 // pred_check
          %p218 = pneg %p41
        $region38: #{tpu_custom_call.1} parent=35 // pred_check_branch
          %220 = sbr.rel (%p218) target = $region40
        $region39: #{tpu_custom_call.1} parent=35 // pred_region
          %221 = dma.done %s214, 128
        $region40: #{tpu_custom_call.1} parent=35 // pred_fallthru
          _
        // Predicated region
        $region41: #{tpu_custom_call.1} parent=35 // pred_check
          %p222 = pneg %p62
        $region42: #{tpu_custom_call.1} parent=35 // pred_check_branch
          %224 = sbr.rel (%p222) target = $region44
        $region43: #{tpu_custom_call.1} parent=35 // pred_region
          %225 = dma.done [#allocation5], 256
        $region44: #{tpu_custom_call.1} parent=35 // pred_fallthru
          _
        // Predicated region
        $region45: #{tpu_custom_call.1} parent=35 // pred_check
          %p226 = pneg %p83
        $region46: #{tpu_custom_call.1} parent=35 // pred_check_branch
          %228 = sbr.rel (%p226) target = $region48
        $region47: #{tpu_custom_call.1} parent=35 // pred_region
          %229 = dma.done [#allocation5], 512
        $region48: #{tpu_custom_call.1} parent=35 // pred_fallthru
          _
        // Predicated region
        $region49: #{tpu_custom_call.1} parent=35 // pred_check
          %p230 = pneg %p104
        $region50: #{tpu_custom_call.1} parent=35 // pred_check_branch
          %232 = sbr.rel (%p230) target = $region52
        $region51: #{tpu_custom_call.1} parent=35 // pred_region
          %233 = dma.done [#allocation8], 512
        $region52: #{tpu_custom_call.1} parent=35 // pred_fallthru
          _
        %s234 = sand.u32 %s28, 1
        %s235 = scalar_lea.sflag [#allocation3], %s234
        %s236 = sand.u32 %s28, 1
        %s237 = smul.addr %s236, 8
        %s238 = scalar_lea.vmem [#allocation2], %s237
        %p239 = pneg %p41
        %p240 = pneg %p38
        %p241 = pneg %p62
        %p242 = pneg %p59
        %p243 = pneg %p83
        %p244 = pneg %p80
        %p245 = pneg %p104
        %p246 = pneg %p101
        %p247 = pneg %p130
        %p248 = pneg %p127
        %p249 = scmp.lt.s32.totalorder %s20, 1
        %s250 = scalar_select %p249, %s20, 1
        %s251 = smul.addr %s250, 8
        %s252 = scalar_lea.vmem %s4, %s251
        %p253 = scmp.lt.s32.totalorder %s20, 1
        %s254 = scalar_select %p253, %s20, 1
        %s255 = smul.addr %s254, 8
        %s256 = scalar_lea.vmem %s4, %s255
        %v257 = vld [vmem:[%s217] sm:$0xff]
        %v258 = vld [vmem:[#allocation4] sm:$0xff]
        %v259 = vld [vmem:[#allocation4 + $0x8] sm:$0x3]
        %vm260 = vcmask 261120
        %v261 = vsel %vm260, %v257, 0.0
        %262 = vadd.xlane.f32.xlu0 %v261
        %v263 = vpop.xlane.xlu0 %262
        %v264 = vrcp.pop 32.0
        %v265 = vmul.f32 %v263, %v264
        %v266 = vsub.f32 %v257, %v265
        %v267 = vmul.f32 %v266, %v266
        %v268 = vsel %vm260, %v267, 0.0
        %269 = vadd.xlane.f32.xlu0 %v268
        %v270 = vpop.xlane.xlu0 %269
        %v271 = vmul.f32 %v270, %v264
        %v272 = vadd.f32 %v271, 1e-05
        %v273 = vrsqrt.pop %v272
        %v274 = vmul.f32 %v266, %v273
        %v275 = vlaneseq
        %v276 = vshrl.u32 %v275, 7
        %v277 = vsub.s32 0, %v276
        %v278 = vrot.slane %v258, %v277
        %v279 = vmul.f32 %v274, %v278
        %v280 = vlaneseq
        %v281 = vshrl.u32 %v280, 7
        %v282 = vsub.s32 1, %v281
        %v283 = vrot.slane %v258, %v282
        %v284 = vadd.f32 %v279, %v283
        %v285 = vld [vmem:[#allocation6] sm:$0xff]
        %v286 = vld [vmem:[#allocation6 + $0x8] sm:$0xff]
        %v287 = vld [vmem:[#allocation6 + $0x10] sm:$0xff]
        %v288 = vld [vmem:[#allocation6 + $0x18] sm:$0xff]
        %v290 = vsel %vm260, %v284, 0
        %292 = vmatprep.subr.mxu0 0.0
        %293 = vmatpush1.msra.mxu0 %v285
        %294 = vmatprep.subr.mxu0 0.0
        %295 = vmatpush1.msra.mxu0 %v286
        %296 = vmatprep.subr.mxu0 0.0
        %297 = vmatpush1.msra.mxu0 %v287
        %298 = vmatprep.subr.mxu0 0.0
        %299 = vmatpush1.msra.mxu0 %v288
        %300 = vmatprep.subr.mxu0 0.0
        %301 = vmatpush1.msra.mxu0 0.0
        %302 = vmatprep.subr.mxu0 0.0
        %303 = vmatpush1.msra.mxu0 0.0
        %304 = vmatprep.subr.mxu0 0.0
        %305 = vmatpush1.msra.mxu0 0.0
        %306 = vmatprep.subr.mxu0 0.0
        %307 = vmatpush1.msra.mxu0 0.0
        %308 = vmatprep.subr.mxu0 0.0
        %309 = vmatpush1.msra.mxu0 0.0
        %310 = vmatprep.subr.mxu0 0.0
        %311 = vmatpush1.msra.mxu0 0.0
        %312 = vmatprep.subr.mxu0 0.0
        %313 = vmatpush1.msra.mxu0 0.0
        %314 = vmatprep.subr.mxu0 0.0
        %315 = vmatpush1.msra.mxu0 0.0
        %316 = vmatprep.subr.mxu0 0.0
        %317 = vmatpush1.msra.mxu0 0.0
        %318 = vmatprep.subr.mxu0 0.0
        %319 = vmatpush1.msra.mxu0 0.0
        %320 = vmatprep.subr.mxu0 0.0
        %321 = vmatpush1.msra.mxu0 0.0
        %322 = vmatprep.subr.mxu0 0.0
        %323 = vmatpush1.msra.mxu0 0.0
        %324 = vmatprep.subr.mxu0 0.0
        %325 = vmatpush1.msra.mxu0 0.0
        %326 = vmatprep.subr.mxu0 0.0
        %327 = vmatpush1.msra.mxu0 0.0
        %328 = vmatprep.subr.mxu0 0.0
        %329 = vmatpush1.msra.mxu0 0.0
        %330 = vmatprep.subr.mxu0 0.0
        %331 = vmatpush1.msra.mxu0 0.0
        %332 = vmatprep.subr.mxu0 0.0
        %333 = vmatpush1.msra.mxu0 0.0
        %334 = vmatprep.subr.mxu0 0.0
        %335 = vmatpush1.msra.mxu0 0.0
        %336 = vmatprep.subr.mxu0 0.0
        %337 = vmatpush1.msra.mxu0 0.0
        %338 = vmatprep.subr.mxu0 0.0
        %339 = vmatpush1.msra.mxu0 0.0
        %340 = vmatprep.subr.mxu0 0.0
        %341 = vmatpush1.msra.mxu0 0.0
        %342 = vmatprep.subr.mxu0 0.0
        %343 = vmatpush1.msra.mxu0 0.0
        %344 = vmatprep.subr.mxu0 0.0
        %345 = vmatpush1.msra.mxu0 0.0
        %346 = vmatprep.subr.mxu0 0.0
        %347 = vmatpush1.msra.mxu0 0.0
        %348 = vmatprep.subr.mxu0 0.0
        %349 = vmatpush1.msra.mxu0 0.0
        %350 = vmatprep.subr.mxu0 0.0
        %351 = vmatpush1.msra.mxu0 0.0
        %352 = vmatprep.subr.mxu0 0.0
        %353 = vmatpush1.msra.mxu0 0.0
        %354 = vmatprep.subr.mxu0 0.0
        %355 = vmatpush1.msra.mxu0 0.0
        %356 = vmatprep.mubr.f32.mxu0 0.0
        %357 = vmatmul.mubr.f32.gmra.mrb[0].mxu0 %v290
        %v358 = vpop.f32.mrb[0].mxu0
        %v359 = vadd.f32 0.0, %v358
        %v360 = vpop.f32.mrb[0].mxu0
        %361 = vdwg.mxu0
        %v362 = vlaneseq
        %v363 = vshrl.u32 %v362, 7
        %v364 = vsub.s32 2, %v363
        %v365 = vrot.slane %v258, %v364
        %v366 = vadd.f32 %v359, %v365
        %v367 = vsel %vm260, %v366, 0.0
        %368 = vadd.xlane.f32.xlu0 %v367
        %v369 = vpop.xlane.xlu0 %368
        %v370 = vmul.f32 %v369, %v264
        %v371 = vsub.f32 %v366, %v370
        %v372 = vmul.f32 %v371, %v371
        %v373 = vsel %vm260, %v372, 0.0
        %374 = vadd.xlane.f32.xlu0 %v373
        %v375 = vpop.xlane.xlu0 %374
        %v376 = vmul.f32 %v375, %v264
        %v377 = vadd.f32 %v376, 1e-05
        %v378 = vrsqrt.pop %v377
        %v379 = vmul.f32 %v371, %v378
        %v380 = vlaneseq
        %v381 = vshrl.u32 %v380, 7
        %v382 = vsub.s32 3, %v381
        %v383 = vrot.slane %v258, %v382
        %v384 = vmul.f32 %v379, %v383
        %v385 = vlaneseq
        %v386 = vshrl.u32 %v385, 7
        %v387 = vsub.s32 4, %v386
        %v388 = vrot.slane %v258, %v387
        %v389 = vadd.f32 %v384, %v388
        %vm390 = vcmp.gt.f32.partialorder %v389, 20.0
        %v391 = vmin.f32 %v389, 20.0
        %v392 = vmul.f32 %v391, 1.442695
        %v393 = vpow.pop %v392
        %v394 = vadd.f32 %v393, 1.0
        %v395 = vlog2.pop %v394
        %v396 = vmul.f32 %v395, 0.6931472
        %v397 = vmul.f32 -0.5, %v393
        %v398 = vadd.f32 %v397, 1.0
        %v399 = vmul.f32 %v398, %v393
        %v400 = vand.u32 2147483647, %v393
        %vm401 = vcmp.lt.f32.partialorder %v400, 0.0004427343
        %v402 = vsel %vm401, %v399, %v396
        %v403 = vsel %vm390, %v389, %v402
        %v404 = vlaneseq
        %v405 = vshrl.u32 %v404, 7
        %v406 = vsub.s32 5, %v405
        %v407 = vrot.slane %v258, %v406
        %409 = vrot.lane.b32.xlu0 %v407, 32
        %v410 = vpop.permute.xlu0 %409
        %v412 = vadd.f32 %v359, %v410
        %v413 = vld [vmem:[#allocation7] sm:$0xff]
        %v414 = vld [vmem:[#allocation7 + $0x8] sm:$0xff]
        %v415 = vld [vmem:[#allocation7 + $0x10] sm:$0xff]
        %v416 = vld [vmem:[#allocation7 + $0x18] sm:$0xff]
        %v418 = vsel %vm260, %v403, 0
        %420 = vmatprep.subr.mxu0 0.0
        %421 = vmatpush1.msra.mxu0 %v413
        %422 = vmatprep.subr.mxu0 0.0
        %423 = vmatpush1.msra.mxu0 %v414
        %424 = vmatprep.subr.mxu0 0.0
        %425 = vmatpush1.msra.mxu0 %v415
        %426 = vmatprep.subr.mxu0 0.0
        %427 = vmatpush1.msra.mxu0 %v416
        %428 = vmatprep.subr.mxu0 0.0
        %429 = vmatpush1.msra.mxu0 0.0
        %430 = vmatprep.subr.mxu0 0.0
        %431 = vmatpush1.msra.mxu0 0.0
        %432 = vmatprep.subr.mxu0 0.0
        %433 = vmatpush1.msra.mxu0 0.0
        %434 = vmatprep.subr.mxu0 0.0
        %435 = vmatpush1.msra.mxu0 0.0
        %436 = vmatprep.subr.mxu0 0.0
        %437 = vmatpush1.msra.mxu0 0.0
        %438 = vmatprep.subr.mxu0 0.0
        %439 = vmatpush1.msra.mxu0 0.0
        %440 = vmatprep.subr.mxu0 0.0
        %441 = vmatpush1.msra.mxu0 0.0
        %442 = vmatprep.subr.mxu0 0.0
        %443 = vmatpush1.msra.mxu0 0.0
        %444 = vmatprep.subr.mxu0 0.0
        %445 = vmatpush1.msra.mxu0 0.0
        %446 = vmatprep.subr.mxu0 0.0
        %447 = vmatpush1.msra.mxu0 0.0
        %448 = vmatprep.subr.mxu0 0.0
        %449 = vmatpush1.msra.mxu0 0.0
        %450 = vmatprep.subr.mxu0 0.0
        %451 = vmatpush1.msra.mxu0 0.0
        %452 = vmatprep.subr.mxu0 0.0
        %453 = vmatpush1.msra.mxu0 0.0
        %454 = vmatprep.subr.mxu0 0.0
        %455 = vmatpush1.msra.mxu0 0.0
        %456 = vmatprep.subr.mxu0 0.0
        %457 = vmatpush1.msra.mxu0 0.0
        %458 = vmatprep.subr.mxu0 0.0
        %459 = vmatpush1.msra.mxu0 0.0
        %460 = vmatprep.subr.mxu0 0.0
        %461 = vmatpush1.msra.mxu0 0.0
        %462 = vmatprep.subr.mxu0 0.0
        %463 = vmatpush1.msra.mxu0 0.0
        %464 = vmatprep.subr.mxu0 0.0
        %465 = vmatpush1.msra.mxu0 0.0
        %466 = vmatprep.subr.mxu0 0.0
        %467 = vmatpush1.msra.mxu0 0.0
        %468 = vmatprep.subr.mxu0 0.0
        %469 = vmatpush1.msra.mxu0 0.0
        %470 = vmatprep.subr.mxu0 0.0
        %471 = vmatpush1.msra.mxu0 0.0
        %472 = vmatprep.subr.mxu0 0.0
        %473 = vmatpush1.msra.mxu0 0.0
        %474 = vmatprep.subr.mxu0 0.0
        %475 = vmatpush1.msra.mxu0 0.0
        %476 = vmatprep.subr.mxu0 0.0
        %477 = vmatpush1.msra.mxu0 0.0
        %478 = vmatprep.subr.mxu0 0.0
        %479 = vmatpush1.msra.mxu0 0.0
        %480 = vmatprep.subr.mxu0 0.0
        %481 = vmatpush1.msra.mxu0 0.0
        %482 = vmatprep.subr.mxu0 0.0
        %483 = vmatpush1.msra.mxu0 0.0
        %484 = vmatprep.mubr.f32.mxu0 0.0
        %485 = vmatmul.mubr.f32.gmra.mrb[0].mxu0 %v418
        %v486 = vpop.f32.mrb[0].mxu0
        %v487 = vadd.f32 0.0, %v486
        %v488 = vpop.f32.mrb[0].mxu0
        %489 = vdwg.mxu0
        %491 = vrot.lane.b32.xlu0 %v487, 32
        %v492 = vpop.permute.xlu0 %491
        %v494 = vadd.f32 %v412, %v492
        %496 = vrot.lane.b32.xlu0 %v494, 96
        %v497 = vpop.permute.xlu0 %496
        %v499 = vsel %vm260, %v497, 0.0
        %500 = vadd.xlane.f32.xlu0 %v499
        %v501 = vpop.xlane.xlu0 %500
        %v502 = vmul.f32 %v501, %v264
        %v503 = vsub.f32 %v494, %v502
        %v504 = vmul.f32 %v503, %v503
        %506 = vrot.lane.b32.xlu0 %v504, 96
        %v507 = vpop.permute.xlu0 %506
        %v509 = vsel %vm260, %v507, 0.0
        %510 = vadd.xlane.f32.xlu0 %v509
        %v511 = vpop.xlane.xlu0 %510
        %v512 = vmul.f32 %v511, %v264
        %v513 = vadd.f32 %v512, 1e-05
        %v514 = vrsqrt.pop %v513
        %v515 = vmul.f32 %v503, %v514
        %v516 = vlaneseq
        %v517 = vshrl.u32 %v516, 7
        %v518 = vsub.s32 6, %v517
        %v519 = vrot.slane %v258, %v518
        %521 = vrot.lane.b32.xlu0 %v519, 32
        %v522 = vpop.permute.xlu0 %521
        %v524 = vmul.f32 %v515, %v522
        %v525 = vlaneseq
        %v526 = vshrl.u32 %v525, 7
        %v527 = vsub.s32 7, %v526
        %v528 = vrot.slane %v258, %v527
        %530 = vrot.lane.b32.xlu0 %v528, 32
        %v531 = vpop.permute.xlu0 %530
        %v533 = vadd.f32 %v524, %v531
        %vm534 = vcmp.gt.f32.partialorder %v533, 20.0
        %v535 = vmin.f32 %v533, 20.0
        %v536 = vmul.f32 %v535, 1.442695
        %v537 = vpow.pop %v536
        %v538 = vadd.f32 %v537, 1.0
        %v539 = vlog2.pop %v538
        %v540 = vmul.f32 %v539, 0.6931472
        %v541 = vmul.f32 -0.5, %v537
        %v542 = vadd.f32 %v541, 1.0
        %v543 = vmul.f32 %v542, %v537
        %v544 = vand.u32 2147483647, %v537
        %vm545 = vcmp.lt.f32.partialorder %v544, 0.0004427343
        %v546 = vsel %vm545, %v543, %v540
        %v547 = vsel %vm534, %v533, %v546
        %v548 = vlaneseq
        %v549 = vshrl.u32 %v548, 7
        %v550 = vsub.s32 0, %v549
        %v551 = vrot.slane %v259, %v550
        %553 = vrot.lane.b32.xlu0 %v551, 32
        %v554 = vpop.permute.xlu0 %553
        %v556 = vmul.f32 %v547, %v554
        %558 = vrot.lane.b32.xlu0 %v556, 96
        %v559 = vpop.permute.xlu0 %558
        %v561 = vsel %vm260, %v559, 0.0
        %562 = vadd.xlane.f32.xlu0 %v561
        %v563 = vpop.xlane.xlu0 %562
        %v564 = vlaneseq
        %v565 = vshrl.u32 %v564, 7
        %v566 = vsub.s32 1, %v565
        %v567 = vrot.slane %v259, %v566
        %v568 = vadd.f32 %v563, %v567
        %vm569 = vcmask 7168
        %570 = vst.msk [vmem:[%s256] sm:$0xff] %vm569, %v568
        %p571 = scmp.lt.s32.totalorder %s20, 1
        %s572 = scalar_select %p571, %s20, 1
        %s573 = smul.addr %s572, 8
        %s574 = scalar_lea.vmem %s4, %s573
        // Predicated region
        $region53: #{tpu_custom_call.1} parent=35 // pred_check
          %p575 = pneg %p127
        $region54: #{tpu_custom_call.1} parent=35 // pred_check_branch
          %577 = sbr.rel (%p575) target = $region56
        $region55: #{tpu_custom_call.1} parent=35 // pred_region
          _
        $region56: #{tpu_custom_call.1} parent=35 // pred_fallthru
          _
      $region36: #{tpu_custom_call.1} parent=5 // pred_fallthru
        _
      %p578 = scmp.le.s32.totalorder 2, %s15
      // Predicated region
      $region57: #{tpu_custom_call.1} parent=5 // pred_check
        %p579 = pneg %p578
      $region58: #{tpu_custom_call.1} parent=5 // pred_check_branch
        %581 = sbr.rel (%p579) target = $region60
      $region59: #{tpu_custom_call.1} parent=5 // pred_region
        %s582 = ssub.s32 %s15, 2
        // Predicated region
        $region61: #{tpu_custom_call.1} parent=59 // pred_check
          %p583 = pneg %p133
        $region62: #{tpu_custom_call.1} parent=59 // pred_check_branch
          %585 = sbr.rel (%p583) target = $region64
        $region63: #{tpu_custom_call.1} parent=59 // pred_region
          %p586 = scmp.lt.s32.totalorder %s21, 1
          %s587 = scalar_select %p586, %s21, 1
          %s588 = smul.addr %s587, 8
          %s589 = scalar_lea.vmem %s4, %s588
        $region64: #{tpu_custom_call.1} parent=59 // pred_fallthru
          _
      $region60: #{tpu_custom_call.1} parent=5 // pred_fallthru
        _
    $region6: #{tpu_custom_call.1} parent=1 // loop_footer
      %s19 = sadd.s32 1, %s15
    $region7: #{tpu_custom_call.1} parent=1 // loop_footer_branch
      %14 = sbr.rel target = $region3
    $region8: #{tpu_custom_call.1} parent=1 // loop_exit
      _
    %590 = vsyncpa [#allocation3], 1
    %s591 = scalar_lea.sflag [#allocation3], 1
    %592 = vsyncpa %s591, 1
    %593 = vsyncpa [#allocation5], 1
    %594 = vsyncpa [#allocation8], 1

</llo_original>
